<compile_context>
chip_gen: v6e
topology: v6e:2x2x1
jax: 0.10.0
libtpu: 0.0.40
codegen_flags: <defaults>
</compile_context>

<pallas_src>
import jax
import jax.numpy as jnp
from jax.experimental import pallas as pl
from jax.experimental.pallas import tpu as pltpu

HIDDEN = 200          # hidden_layer in the PyTorch module (true width)
DIM_Y = 16            # dimension_y (input features)  -- synthetic choice
DIM_X = 8             # dimension_x (output features) -- synthetic choice
NEG_SLOPE = 0.01      # F.leaky_relu default negative_slope

HID_PAD = 256         # MXU-friendly hidden width (zero-padded)
OUT_PAD = 128         # MXU-friendly N for the last matmul (store is sliced to DIM_X)


def _leaky_relu(v):
    # max(v, a*v) == leaky_relu(v) for 0 < a < 1 (matches where(v>0,...) incl. v==0).
    return jnp.maximum(v, NEG_SLOPE * v)


def mlp_kernel(x_ref,
               w1_ref, b1_ref,
               w2_ref, b2_ref,
               w3_ref, b3_ref,
               w4_ref, b4_ref,
               o_ref):
    # bf16 operands on the MXU, f32 accumulation; elementwise math stays f32
    # (no bf16 VPU dependence -> fine on v5e as well).
    x = x_ref[...].astype(jnp.bfloat16)
    h = jnp.dot(x, w1_ref[...], preferred_element_type=jnp.float32)
    h = _leaky_relu(h + b1_ref[...])
    h = jnp.dot(h.astype(jnp.bfloat16), w2_ref[...],
                preferred_element_type=jnp.float32)
    h = _leaky_relu(h + b2_ref[...])
    h = jnp.dot(h.astype(jnp.bfloat16), w3_ref[...],
                preferred_element_type=jnp.float32)
    h = _leaky_relu(h + b3_ref[...])
    out = jnp.dot(h.astype(jnp.bfloat16), w4_ref[...],
                  preferred_element_type=jnp.float32)
    out = out + b4_ref[...]
    # Store only the true output columns; the 128-wide accumulator stays in VMEM.
    o_ref[...] = out[:, :DIM_X].astype(o_ref.dtype)


def _round_up(n, m):
    return ((n + m - 1) // m) * m


def init_params(key):
    """Deterministic synthetic init at TRUE shapes (PyTorch-Linear-like bounds).

    Weights stored (in_features, out_features): kernel computes x @ W + b,
    equivalent to PyTorch's x @ W_pt.T + b.
    """
    def linear(k, fan_in, fan_out):
        kw, kb = jax.random.split(k)
        bound = 1.0 / jnp.sqrt(fan_in)
        w = jax.random.uniform(kw, (fan_in, fan_out), jnp.float32, -bound, bound)
        b = jax.random.uniform(kb, (1, fan_out), jnp.float32, -bound, bound)
        return w, b

    k1, k2, k3, k4 = jax.random.split(key, 4)
    w1, b1 = linear(k1, DIM_Y, HIDDEN)
    w2, b2 = linear(k2, HIDDEN, HIDDEN)
    w3, b3 = linear(k3, HIDDEN, HIDDEN)
    w4, b4 = linear(k4, HIDDEN, DIM_X)
    return {"w1": w1, "b1": b1, "w2": w2, "b2": b2,
            "w3": w3, "b3": b3, "w4": w4, "b4": b4}


def pad_params(p):
    """Zero-pad to MXU-friendly shapes; weights -> bf16, biases stay f32."""
    def padw(w, rows, cols):
        out = jnp.zeros((rows, cols), jnp.float32)
        out = out.at[: w.shape[0], : w.shape[1]].set(w.astype(jnp.float32))
        return out.astype(jnp.bfloat16)

    def padb(b, cols):
        out = jnp.zeros((1, cols), jnp.float32)
        return out.at[:, : b.shape[1]].set(b.astype(jnp.float32))

    return {
        "w1": padw(p["w1"], DIM_Y, HID_PAD),   "b1": padb(p["b1"], HID_PAD),
        "w2": padw(p["w2"], HID_PAD, HID_PAD), "b2": padb(p["b2"], HID_PAD),
        "w3": padw(p["w3"], HID_PAD, HID_PAD), "b3": padb(p["b3"], HID_PAD),
        "w4": padw(p["w4"], HID_PAD, OUT_PAD), "b4": padb(p["b4"], OUT_PAD),
    }


def _pick_tile(B, tm):
    """Batch tile: multiple of 128, amortizes step overhead, >=2 steps when B>TM."""
    tm = max(128, (tm // 128) * 128)
    TM = min(tm, _round_up(max(B, 1), 128))
    if B > TM:
        # Ensure at least 2 grid steps so v7x's two TensorCores both get work.
        TM = min(TM, _round_up(-(-B // 2), 128))
    return max(TM, 128)


def generator_y_x_forward(x, padded_params, *, tm=1024):
    """x: (B, DIM_Y) float32. padded_params: output of pad_params()."""
    B = x.shape[0]
    TM = _pick_tile(B, tm)
    B_pad = _round_up(max(B, 1), TM)

    # Only pad the batch dim when needed; bf16 cast happens inside the kernel.
    if B_pad != B:
        x_p = jnp.zeros((B_pad, DIM_Y), x.dtype).at[:B].set(x)
    else:
        x_p = x

    pp = padded_params
    grid = (B_pad // TM,)

    flops = 2 * B_pad * (DIM_Y * HID_PAD + 2 * HID_PAD * HID_PAD
                         + HID_PAD * OUT_PAD)
    param_bytes = sum(int(v.size) * v.dtype.itemsize for v in pp.values())
    bytes_accessed = (param_bytes
                      + int(x_p.size) * x_p.dtype.itemsize
                      + B_pad * DIM_X * 4)

    const = lambda i: (0, 0)   # weights/biases: same block every step -> resident in VMEM

    out = pl.pallas_call(
        mlp_kernel,
        out_shape=jax.ShapeDtypeStruct((B_pad, DIM_X), jnp.float32),
        grid_spec=pltpu.PrefetchScalarGridSpec(
            num_scalar_prefetch=0,
            grid=grid,
            in_specs=[
                pl.BlockSpec((TM, DIM_Y), lambda i: (i, 0)),        # x tile (f32)
                pl.BlockSpec((DIM_Y, HID_PAD), const),              # w1
                pl.BlockSpec((1, HID_PAD), const),                  # b1
                pl.BlockSpec((HID_PAD, HID_PAD), const),            # w2
                pl.BlockSpec((1, HID_PAD), const),                  # b2
                pl.BlockSpec((HID_PAD, HID_PAD), const),            # w3
                pl.BlockSpec((1, HID_PAD), const),                  # b3
                pl.BlockSpec((HID_PAD, OUT_PAD), const),            # w4
                pl.BlockSpec((1, OUT_PAD), const),                  # b4
            ],
            out_specs=pl.BlockSpec((TM, DIM_X), lambda i: (i, 0)),  # true 8 cols only
        ),
        compiler_params=pltpu.CompilerParams(
            dimension_semantics=("parallel",),   # v7x: shard batch tiles over 2 TCs
            vmem_limit_bytes=32 * 1024 * 1024,   # explicit limit (v5e default is ~16 MiB)
        ),
        cost_estimate=pl.CostEstimate(
            flops=flops, transcendentals=0, bytes_accessed=bytes_accessed),
    )(x_p,
      pp["w1"], pp["b1"], pp["w2"], pp["b2"],
      pp["w3"], pp["b3"], pp["w4"], pp["b4"])

    return out[:B]


def reference_forward_f32(x, p):
    """Pure f32 math at true shapes (PyTorch semantics)."""
    h = x
    for wi, bi in (("w1", "b1"), ("w2", "b2"), ("w3", "b3")):
        z = h @ p[wi] + p[bi]
        h = jnp.maximum(z, NEG_SLOPE * z)
    return h @ p["w4"] + p["b4"]


def reference_forward_matched(x, pp):
    """Same numerics as the kernel (bf16 operands, f32 accumulation, padded)."""
    h = x.astype(jnp.bfloat16)
    for wi, bi in (("w1", "b1"), ("w2", "b2"), ("w3", "b3")):
        z = jnp.dot(h, pp[wi], preferred_element_type=jnp.float32) + pp[bi]
        h = jnp.maximum(z, NEG_SLOPE * z).astype(jnp.bfloat16)
    z = jnp.dot(h, pp["w4"], preferred_element_type=jnp.float32) + pp["b4"]
    return z[:, :DIM_X]


if __name__ == "__main__":
    key = jax.random.PRNGKey(0)
    kx, kp = jax.random.split(key)
    B = 8
    x = jax.random.normal(kx, (B, DIM_Y), jnp.float32)

    params = init_params(kp)
    pp = pad_params(params)

    out = generator_y_x_forward(x, pp)
    out = jax.block_until_ready(out)
    assert out.shape == (B, DIM_X)

    ref_matched = reference_forward_matched(x, pp)   # same numerics as kernel
    ref_f32 = reference_forward_f32(x, params)       # original f32 semantics
    assert jnp.allclose(out, ref_matched, atol=2e-2, rtol=2e-2), \
        "mismatch vs bf16-matched reference"
    assert jnp.allclose(out, ref_f32, atol=5e-2, rtol=5e-2), \
        "mismatch vs f32 reference"
    print("KERNEL_OK")
</pallas_src>

<mosaic_0001>
module attributes {stable_mosaic.version = 11 : i64} {
  func.func @mlp_kernel(%arg0: i32, %arg1: memref<128x16xf32, #tpu.memory_space<vmem>>, %arg2: memref<16x256xbf16, #tpu.memory_space<vmem>>, %arg3: memref<1x256xf32, #tpu.memory_space<vmem>>, %arg4: memref<256x256xbf16, #tpu.memory_space<vmem>>, %arg5: memref<1x256xf32, #tpu.memory_space<vmem>>, %arg6: memref<256x256xbf16, #tpu.memory_space<vmem>>, %arg7: memref<1x256xf32, #tpu.memory_space<vmem>>, %arg8: memref<256x128xbf16, #tpu.memory_space<vmem>>, %arg9: memref<1x128xf32, #tpu.memory_space<vmem>>, %arg10: memref<128x8xf32, #tpu.memory_space<vmem>>) attributes {dimension_semantics = [#tpu.dimension_semantics<parallel>], iteration_bounds = array<i64: 1>, scalar_prefetch = 0 : i64, scratch_operands = 0 : i64, tpu.core_type = #tpu.core_type<tc>, window_params = [{transform_indices = @transform_0, window_bounds = array<i64: 128, 16>}, {pipeline_mode = #tpu.pipeline_mode<synchronous>, transform_indices = @transform_1, window_bounds = array<i64: 16, 256>}, {pipeline_mode = #tpu.pipeline_mode<synchronous>, transform_indices = @transform_2, window_bounds = array<i64: 1, 256>}, {pipeline_mode = #tpu.pipeline_mode<synchronous>, transform_indices = @transform_3, window_bounds = array<i64: 256, 256>}, {pipeline_mode = #tpu.pipeline_mode<synchronous>, transform_indices = @transform_4, window_bounds = array<i64: 1, 256>}, {pipeline_mode = #tpu.pipeline_mode<synchronous>, transform_indices = @transform_5, window_bounds = array<i64: 256, 256>}, {pipeline_mode = #tpu.pipeline_mode<synchronous>, transform_indices = @transform_6, window_bounds = array<i64: 1, 256>}, {pipeline_mode = #tpu.pipeline_mode<synchronous>, transform_indices = @transform_7, window_bounds = array<i64: 256, 128>}, {pipeline_mode = #tpu.pipeline_mode<synchronous>, transform_indices = @transform_8, window_bounds = array<i64: 1, 128>}, {transform_indices = @transform_9, window_bounds = array<i64: 128, 8>}]} {
    %c0 = arith.constant 0 : index
    %c0_0 = arith.constant 0 : index
    %0 = vector.load %arg1[%c0, %c0_0] : memref<128x16xf32, #tpu.memory_space<vmem>>, vector<128x16xf32>
    %1 = arith.truncf %0 : vector<128x16xf32> to vector<128x16xbf16>
    %c0_1 = arith.constant 0 : index
    %c0_2 = arith.constant 0 : index
    %2 = vector.load %arg2[%c0_1, %c0_2] : memref<16x256xbf16, #tpu.memory_space<vmem>>, vector<16x256xbf16>
    %cst = arith.constant dense<0.000000e+00> : vector<128x256xf32>
    %3 = tpu.matmul %1, %2, %cst {dimension_numbers = #tpu.dot_dimension_numbers<[1], [0], [0], [1], [0, 0, 1, 1], [], []>} : vector<128x16xbf16>, vector<16x256xbf16>, vector<128x256xf32> -> vector<128x256xf32>
    %c0_3 = arith.constant 0 : index
    %c0_4 = arith.constant 0 : index
    %4 = vector.load %arg3[%c0_3, %c0_4] : memref<1x256xf32, #tpu.memory_space<vmem>>, vector<1x256xf32>
    %5 = vector.broadcast %4 : vector<1x256xf32> to vector<128x256xf32>
    %6 = arith.addf %3, %5 : vector<128x256xf32>
    %cst_5 = arith.constant 0.00999999977 : f32
    %7 = vector.broadcast %cst_5 : f32 to vector<128x256xf32>
    %8 = arith.mulf %7, %6 : vector<128x256xf32>
    %9 = arith.maximumf %6, %8 : vector<128x256xf32>
    %10 = arith.truncf %9 : vector<128x256xf32> to vector<128x256xbf16>
    %c0_6 = arith.constant 0 : index
    %c0_7 = arith.constant 0 : index
    %11 = vector.load %arg4[%c0_6, %c0_7] : memref<256x256xbf16, #tpu.memory_space<vmem>>, vector<256x256xbf16>
    %cst_8 = arith.constant dense<0.000000e+00> : vector<128x256xf32>
    %12 = tpu.matmul %10, %11, %cst_8 {dimension_numbers = #tpu.dot_dimension_numbers<[1], [0], [0], [1], [0, 0, 1, 1], [], []>} : vector<128x256xbf16>, vector<256x256xbf16>, vector<128x256xf32> -> vector<128x256xf32>
    %c0_9 = arith.constant 0 : index
    %c0_10 = arith.constant 0 : index
    %13 = vector.load %arg5[%c0_9, %c0_10] : memref<1x256xf32, #tpu.memory_space<vmem>>, vector<1x256xf32>
    %14 = vector.broadcast %13 : vector<1x256xf32> to vector<128x256xf32>
    %15 = arith.addf %12, %14 : vector<128x256xf32>
    %cst_11 = arith.constant 0.00999999977 : f32
    %16 = vector.broadcast %cst_11 : f32 to vector<128x256xf32>
    %17 = arith.mulf %16, %15 : vector<128x256xf32>
    %18 = arith.maximumf %15, %17 : vector<128x256xf32>
    %19 = arith.truncf %18 : vector<128x256xf32> to vector<128x256xbf16>
    %c0_12 = arith.constant 0 : index
    %c0_13 = arith.constant 0 : index
    %20 = vector.load %arg6[%c0_12, %c0_13] : memref<256x256xbf16, #tpu.memory_space<vmem>>, vector<256x256xbf16>
    %cst_14 = arith.constant dense<0.000000e+00> : vector<128x256xf32>
    %21 = tpu.matmul %19, %20, %cst_14 {dimension_numbers = #tpu.dot_dimension_numbers<[1], [0], [0], [1], [0, 0, 1, 1], [], []>} : vector<128x256xbf16>, vector<256x256xbf16>, vector<128x256xf32> -> vector<128x256xf32>
    %c0_15 = arith.constant 0 : index
    %c0_16 = arith.constant 0 : index
    %22 = vector.load %arg7[%c0_15, %c0_16] : memref<1x256xf32, #tpu.memory_space<vmem>>, vector<1x256xf32>
    %23 = vector.broadcast %22 : vector<1x256xf32> to vector<128x256xf32>
    %24 = arith.addf %21, %23 : vector<128x256xf32>
    %cst_17 = arith.constant 0.00999999977 : f32
    %25 = vector.broadcast %cst_17 : f32 to vector<128x256xf32>
    %26 = arith.mulf %25, %24 : vector<128x256xf32>
    %27 = arith.maximumf %24, %26 : vector<128x256xf32>
    %28 = arith.truncf %27 : vector<128x256xf32> to vector<128x256xbf16>
    %c0_18 = arith.constant 0 : index
    %c0_19 = arith.constant 0 : index
    %29 = vector.load %arg8[%c0_18, %c0_19] : memref<256x128xbf16, #tpu.memory_space<vmem>>, vector<256x128xbf16>
    %cst_20 = arith.constant dense<0.000000e+00> : vector<128x128xf32>
    %30 = tpu.matmul %28, %29, %cst_20 {dimension_numbers = #tpu.dot_dimension_numbers<[1], [0], [0], [1], [0, 0, 1, 1], [], []>} : vector<128x256xbf16>, vector<256x128xbf16>, vector<128x128xf32> -> vector<128x128xf32>
    %c0_21 = arith.constant 0 : index
    %c0_22 = arith.constant 0 : index
    %31 = vector.load %arg9[%c0_21, %c0_22] : memref<1x128xf32, #tpu.memory_space<vmem>>, vector<1x128xf32>
    %32 = vector.broadcast %31 : vector<1x128xf32> to vector<128x128xf32>
    %33 = arith.addf %30, %32 : vector<128x128xf32>
    %34 = vector.extract_strided_slice %33 {offsets = [0, 0], sizes = [128, 8], strides = [1, 1]} : vector<128x128xf32> to vector<128x8xf32>
    %c0_23 = arith.constant 0 : index
    %c0_24 = arith.constant 0 : index
    %35 = vector.load %arg10[%c0_23, %c0_24] : memref<128x8xf32, #tpu.memory_space<vmem>>, vector<128x8xf32>
    tpu.vector_store %arg10[%c0_23, %c0_24], %34 {strides = array<i32>} : memref<128x8xf32, #tpu.memory_space<vmem>>, vector<128x8xf32>,
    return
  }
  func.func @transform_0(%arg0: i32) -> (i32, i32) {
    %c0_i32 = arith.constant 0 : i32
    %c0_i32_0 = arith.constant 0 : i32
    return %arg0, %c0_i32 : i32, i32
  }
  func.func @transform_1(%arg0: i32) -> (i32, i32) {
    %c0_i32 = arith.constant 0 : i32
    %c0_i32_0 = arith.constant 0 : i32
    %c0_i32_1 = arith.constant 0 : i32
    return %c0_i32, %c0_i32_0 : i32, i32
  }
  func.func @transform_2(%arg0: i32) -> (i32, i32) {
    %c0_i32 = arith.constant 0 : i32
    %c0_i32_0 = arith.constant 0 : i32
    %c0_i32_1 = arith.constant 0 : i32
    return %c0_i32, %c0_i32_0 : i32, i32
  }
  func.func @transform_3(%arg0: i32) -> (i32, i32) {
    %c0_i32 = arith.constant 0 : i32
    %c0_i32_0 = arith.constant 0 : i32
    %c0_i32_1 = arith.constant 0 : i32
    return %c0_i32, %c0_i32_0 : i32, i32
  }
  func.func @transform_4(%arg0: i32) -> (i32, i32) {
    %c0_i32 = arith.constant 0 : i32
    %c0_i32_0 = arith.constant 0 : i32
    %c0_i32_1 = arith.constant 0 : i32
    return %c0_i32, %c0_i32_0 : i32, i32
  }
  func.func @transform_5(%arg0: i32) -> (i32, i32) {
    %c0_i32 = arith.constant 0 : i32
    %c0_i32_0 = arith.constant 0 : i32
    %c0_i32_1 = arith.constant 0 : i32
    return %c0_i32, %c0_i32_0 : i32, i32
  }
  func.func @transform_6(%arg0: i32) -> (i32, i32) {
    %c0_i32 = arith.constant 0 : i32
    %c0_i32_0 = arith.constant 0 : i32
    %c0_i32_1 = arith.constant 0 : i32
    return %c0_i32, %c0_i32_0 : i32, i32
  }
  func.func @transform_7(%arg0: i32) -> (i32, i32) {
    %c0_i32 = arith.constant 0 : i32
    %c0_i32_0 = arith.constant 0 : i32
    %c0_i32_1 = arith.constant 0 : i32
    return %c0_i32, %c0_i32_0 : i32, i32
  }
  func.func @transform_8(%arg0: i32) -> (i32, i32) {
    %c0_i32 = arith.constant 0 : i32
    %c0_i32_0 = arith.constant 0 : i32
    %c0_i32_1 = arith.constant 0 : i32
    return %c0_i32, %c0_i32_0 : i32, i32
  }
  func.func @transform_9(%arg0: i32) -> (i32, i32) {
    %c0_i32 = arith.constant 0 : i32
    %c0_i32_0 = arith.constant 0 : i32
    return %arg0, %c0_i32 : i32, i32
  }
}

</mosaic_0001>

<llo_original>
// kernel: tpu_custom_call.1
$region0: #{tpu_custom_call.1}
  #allocation0 [shape = 'u32[]', space=smem, size = 0x4, offset = 0x4, fixed_abs, tag = 'smem constant byte address 0x4 - core index']
  #allocation1 [shape = 'u32[144,128]{1,0:T(1,128)}', space=vmem, size = 0x12000, scoped, tag = 'internal scratch']
  %s0 = inlined_call_operand.vmem [shape: f32[128,16], index: 0, kind: input, shape index: {}]
  %s1 = inlined_call_operand.vmem [shape: bf16[16,256], index: 1, kind: input, shape index: {}]
  %s2 = inlined_call_operand.vmem [shape: f32[1,256], index: 2, kind: input, shape index: {}]
  %s3 = inlined_call_operand.hbm [shape: bf16[256,256], index: 3, kind: input, shape index: {}]
  %s4 = inlined_call_operand.vmem [shape: f32[1,256], index: 4, kind: input, shape index: {}]
  %s5 = inlined_call_operand.hbm [shape: bf16[256,256], index: 5, kind: input, shape index: {}]
  %s6 = inlined_call_operand.vmem [shape: f32[1,256], index: 6, kind: input, shape index: {}]
  %s7 = inlined_call_operand.vmem [shape: bf16[256,128], index: 7, kind: input, shape index: {}]
  %s8 = inlined_call_operand.vmem [shape: f32[1,128], index: 8, kind: input, shape index: {}]
  %s9 = inlined_call_operand.vmem [shape: f32[128,8], index: 9, kind: output, shape index: {}]
  %s10 = sld [smem:[#allocation0]]
  $region54: #{tpu_custom_call.1} parent=0
    _
  %s12 = ssub.s32 1, %s10
  %s13 = scalar_select 0, %s12, %s10
  $region1: #{tpu_custom_call.1} parent=0
    #allocation2 [shape = 'u8[131072]{0}', space=vmem, size = 0x20000, scoped, tag = 'input window, operand 3, single buffered']
    #allocation3 [shape = 's32[1]{0}', space=sflag, size = 0x4, scoped, tag = 'scoped memory for tpu_custom_call.1']
    #allocation4 [shape = 'u8[131072]{0}', space=vmem, size = 0x20000, scoped, tag = 'input window, operand 5, single buffered']
    #allocation5 [shape = 's32[1]{0}', space=sflag, size = 0x4, scoped, tag = 'scoped memory for tpu_custom_call.1']
    %14 = vsyncpa [#allocation3], 0
    %15 = vsyncpa [#allocation5], 0
    // Predicated region
    $region2: #{tpu_custom_call.1} parent=1 // pred_check
      _
    $region3: #{tpu_custom_call.1} parent=1 // pred_check_branch
      %17 = sbr.rel (0) target = $region5
    $region4: #{tpu_custom_call.1} parent=1 // pred_region
      _
    $region5: #{tpu_custom_call.1} parent=1 // pred_fallthru
      _
    // Predicated region
    $region6: #{tpu_custom_call.1} parent=1 // pred_check
      _
    $region7: #{tpu_custom_call.1} parent=1 // pred_check_branch
      %19 = sbr.rel (0) target = $region9
    $region8: #{tpu_custom_call.1} parent=1 // pred_region
      _
    $region9: #{tpu_custom_call.1} parent=1 // pred_fallthru
      _
    // Predicated region
    $region10: #{tpu_custom_call.1} parent=1 // pred_check
      _
    $region11: #{tpu_custom_call.1} parent=1 // pred_check_branch
      %21 = sbr.rel (0) target = $region13
    $region12: #{tpu_custom_call.1} parent=1 // pred_region
      _
    $region13: #{tpu_custom_call.1} parent=1 // pred_fallthru
      _
    // Predicated region
    $region14: #{tpu_custom_call.1} parent=1 // pred_check
      _
    $region15: #{tpu_custom_call.1} parent=1 // pred_check_branch
      %23 = sbr.rel (0) target = $region17
    $region16: #{tpu_custom_call.1} parent=1 // pred_region
      %s25 = ssub.s32 4096, 4096
      %26 = vsyncadd [#allocation3], %s25
      %s27 = sshll.u32 [#allocation2], 4
      %s28 = int_to_ptr.vmem [resolvable:$true] %s27
      %33 = dma.hbm_to_vmem [thread:$0]  %s3, 4096, %s28, [#allocation3], 128, 128, 8
    $region17: #{tpu_custom_call.1} parent=1 // pred_fallthru
      _
    // Predicated region
    $region18: #{tpu_custom_call.1} parent=1 // pred_check
      _
    $region19: #{tpu_custom_call.1} parent=1 // pred_check_branch
      %35 = sbr.rel (0) target = $region21
    $region20: #{tpu_custom_call.1} parent=1 // pred_region
      _
    $region21: #{tpu_custom_call.1} parent=1 // pred_fallthru
      _
    // Predicated region
    $region22: #{tpu_custom_call.1} parent=1 // pred_check
      _
    $region23: #{tpu_custom_call.1} parent=1 // pred_check_branch
      %37 = sbr.rel (0) target = $region25
    $region24: #{tpu_custom_call.1} parent=1 // pred_region
      %s39 = ssub.s32 4096, 4096
      %40 = vsyncadd [#allocation5], %s39
      %s41 = sshll.u32 [#allocation4], 4
      %s42 = int_to_ptr.vmem [resolvable:$true] %s41
      %47 = dma.hbm_to_vmem [thread:$0]  %s5, 4096, %s42, [#allocation5], 128, 128, 8
    $region25: #{tpu_custom_call.1} parent=1 // pred_fallthru
      _
    // Predicated region
    $region26: #{tpu_custom_call.1} parent=1 // pred_check
      _
    $region27: #{tpu_custom_call.1} parent=1 // pred_check_branch
      %49 = sbr.rel (0) target = $region29
    $region28: #{tpu_custom_call.1} parent=1 // pred_region
      _
    $region29: #{tpu_custom_call.1} parent=1 // pred_fallthru
      _
    // Predicated region
    $region30: #{tpu_custom_call.1} parent=1 // pred_check
      _
    $region31: #{tpu_custom_call.1} parent=1 // pred_check_branch
      %51 = sbr.rel (0) target = $region33
    $region32: #{tpu_custom_call.1} parent=1 // pred_region
      _
    $region33: #{tpu_custom_call.1} parent=1 // pred_fallthru
      _
    // Predicated region
    $region34: #{tpu_custom_call.1} parent=1 // pred_check
      _
    $region35: #{tpu_custom_call.1} parent=1 // pred_check_branch
      %53 = sbr.rel (0) target = $region37
    $region36: #{tpu_custom_call.1} parent=1 // pred_region
      _
    $region37: #{tpu_custom_call.1} parent=1 // pred_fallthru
      _
    // Predicated region
    $region38: #{tpu_custom_call.1} parent=1 // pred_check
      _
    $region39: #{tpu_custom_call.1} parent=1 // pred_check_branch
      %55 = sbr.rel (0) target = $region41
    $region40: #{tpu_custom_call.1} parent=1 // pred_region
      %56 = dma.done [#allocation3], 4096
    $region41: #{tpu_custom_call.1} parent=1 // pred_fallthru
      _
    // Predicated region
    $region42: #{tpu_custom_call.1} parent=1 // pred_check
      _
    $region43: #{tpu_custom_call.1} parent=1 // pred_check_branch
      %58 = sbr.rel (0) target = $region45
    $region44: #{tpu_custom_call.1} parent=1 // pred_region
      %59 = dma.done [#allocation5], 4096
    $region45: #{tpu_custom_call.1} parent=1 // pred_fallthru
      _
    %v61 = vld [vmem:[%s0] sm:$0xff]
    %v62 = vld [vmem:[%s0 + $0x8] sm:$0xff]
    %v63 = vld [vmem:[%s0 + $0x10] sm:$0xff]
    %v64 = vld [vmem:[%s0 + $0x18] sm:$0xff]
    %v65 = vld [vmem:[%s0 + $0x20] sm:$0xff]
    %v66 = vld [vmem:[%s0 + $0x28] sm:$0xff]
    %v67 = vld [vmem:[%s0 + $0x30] sm:$0xff]
    %v68 = vld [vmem:[%s0 + $0x38] sm:$0xff]
    %v69 = vld [vmem:[%s0 + $0x40] sm:$0xff]
    %v70 = vld [vmem:[%s0 + $0x48] sm:$0xff]
    %v71 = vld [vmem:[%s0 + $0x50] sm:$0xff]
    %v72 = vld [vmem:[%s0 + $0x58] sm:$0xff]
    %v73 = vld [vmem:[%s0 + $0x60] sm:$0xff]
    %v74 = vld [vmem:[%s0 + $0x68] sm:$0xff]
    %v75 = vld [vmem:[%s0 + $0x70] sm:$0xff]
    %v76 = vld [vmem:[%s0 + $0x78] sm:$0xff]
    %v77 = vpack.c.bf16 %v62, %v61
    %v78 = vpack.c.bf16 %v64, %v63
    %v79 = vpack.c.bf16 %v66, %v65
    %v80 = vpack.c.bf16 %v68, %v67
    %v81 = vpack.c.bf16 %v70, %v69
    %v82 = vpack.c.bf16 %v72, %v71
    %v83 = vpack.c.bf16 %v74, %v73
    %v84 = vpack.c.bf16 %v76, %v75
    %v85 = vld [vmem:[%s1] sm:$0xff]
    %v86 = vld [vmem:[%s1 + $0x8] sm:$0xff]
    %v87 = vld [vmem:[%s2] sm:$0x3]
    %v89 = vlaneseq
    %v90 = vshrl.u32 %v89, 7
    %v91 = vsub.s32 0, %v90
    %v92 = vrot.slane %v87, %v91
    %v93 = vlaneseq
    %v94 = vshrl.u32 %v93, 7
    %v95 = vsub.s32 1, %v94
    %v96 = vrot.slane %v87, %v95
    %v101 = vunpack.c.l.b16 %v85
    %v102 = vunpack.c.h.b16 %v85
    %v103 = vunpack.c.l.b16 %v86
    %v104 = vunpack.c.h.b16 %v86
    %v105 = vpack.c.b16 %v103, %v101
    %v106 = vpack.c.b16 %v104, %v102
    %vm109 = vcmask 130048
    %v111 = vsel %vm109, %v77, 0
    %v114 = vsel %vm109, %v78, 0
    %v117 = vsel %vm109, %v79, 0
    %v120 = vsel %vm109, %v80, 0
    %v123 = vsel %vm109, %v81, 0
    %v126 = vsel %vm109, %v82, 0
    %v129 = vsel %vm109, %v83, 0
    %v132 = vsel %vm109, %v84, 0
    %134 = vmatprep.subr.bf16.mxu0 0
    %135 = vmatpush1.bf16.msra.mxu0 0
    %136 = vmatprep.subr.bf16.mxu0 0
    %137 = vmatpush1.bf16.msra.mxu0 0
    %138 = vmatprep.subr.bf16.mxu0 0
    %139 = vmatpush1.bf16.msra.mxu0 0
    %140 = vmatprep.subr.bf16.mxu0 0
    %141 = vmatpush1.bf16.msra.mxu0 0
    %142 = vmatprep.subr.bf16.mxu0 0
    %143 = vmatpush1.bf16.msra.mxu0 0
    %144 = vmatprep.subr.bf16.mxu0 0
    %145 = vmatpush1.bf16.msra.mxu0 0
    %146 = vmatprep.subr.bf16.mxu0 0
    %147 = vmatpush1.bf16.msra.mxu0 0
    %148 = vmatprep.subr.bf16.mxu0 %v106
    %149 = vmatpush1.bf16.msra.mxu0 %v105
    %150 = vmatprep.subr.bf16.mxu0 0
    %151 = vmatpush2.bf16.msra.mxu0 0
    %152 = vmatprep.subr.bf16.mxu0 0
    %153 = vmatpush2.bf16.msra.mxu0 0
    %154 = vmatprep.subr.bf16.mxu0 0
    %155 = vmatpush2.bf16.msra.mxu0 0
    %156 = vmatprep.subr.bf16.mxu0 0
    %157 = vmatpush2.bf16.msra.mxu0 0
    %158 = vmatprep.subr.bf16.mxu0 0
    %159 = vmatpush2.bf16.msra.mxu0 0
    %160 = vmatprep.subr.bf16.mxu0 0
    %161 = vmatpush2.bf16.msra.mxu0 0
    %162 = vmatprep.subr.bf16.mxu0 0
    %163 = vmatpush2.bf16.msra.mxu0 0
    %164 = vmatprep.subr.bf16.mxu0 0
    %165 = vmatpush2.bf16.msra.mxu0 0
    %166 = vmatprep.mubr.bf16.mxu0 0
    %167 = vmatmul.mubr.bf16.gmra.mxu0 %v111
    %v168 = vpop.f32.mrf.mxu0
    %v169 = vadd.f32 %v92, %v168
    %v170 = vpop.f32.mrf.mxu0
    %v171 = vadd.f32 %v96, %v170
    %v172 = vpop.f32.mrf.mxu0
    %v173 = vadd.f32 %v92, %v172
    %v174 = vpop.f32.mrf.mxu0
    %v175 = vadd.f32 %v96, %v174
    %176 = vmatprep.mubr.bf16.mxu0 0
    %177 = vmatmul.mubr.bf16.gmra.mxu0 %v114
    %v178 = vpop.f32.mrf.mxu0
    %v179 = vadd.f32 %v92, %v178
    %v180 = vpop.f32.mrf.mxu0
    %v181 = vadd.f32 %v96, %v180
    %v182 = vpop.f32.mrf.mxu0
    %v183 = vadd.f32 %v92, %v182
    %v184 = vpop.f32.mrf.mxu0
    %v185 = vadd.f32 %v96, %v184
    %186 = vmatprep.mubr.bf16.mxu0 0
    %187 = vmatmul.mubr.bf16.gmra.mxu0 %v117
    %v188 = vpop.f32.mrf.mxu0
    %v189 = vadd.f32 %v92, %v188
    %v190 = vpop.f32.mrf.mxu0
    %v191 = vadd.f32 %v96, %v190
    %v192 = vpop.f32.mrf.mxu0
    %v193 = vadd.f32 %v92, %v192
    %v194 = vpop.f32.mrf.mxu0
    %v195 = vadd.f32 %v96, %v194
    %196 = vmatprep.mubr.bf16.mxu0 0
    %197 = vmatmul.mubr.bf16.gmra.mxu0 %v120
    %v198 = vpop.f32.mrf.mxu0
    %v199 = vadd.f32 %v92, %v198
    %v200 = vpop.f32.mrf.mxu0
    %v201 = vadd.f32 %v96, %v200
    %v202 = vpop.f32.mrf.mxu0
    %v203 = vadd.f32 %v92, %v202
    %v204 = vpop.f32.mrf.mxu0
    %v205 = vadd.f32 %v96, %v204
    %206 = vmatprep.mubr.bf16.mxu0 0
    %207 = vmatmul.mubr.bf16.gmra.mxu0 %v123
    %v208 = vpop.f32.mrf.mxu0
    %v209 = vadd.f32 %v92, %v208
    %v210 = vpop.f32.mrf.mxu0
    %v211 = vadd.f32 %v96, %v210
    %v212 = vpop.f32.mrf.mxu0
    %v213 = vadd.f32 %v92, %v212
    %v214 = vpop.f32.mrf.mxu0
    %v215 = vadd.f32 %v96, %v214
    %216 = vmatprep.mubr.bf16.mxu0 0
    %217 = vmatmul.mubr.bf16.gmra.mxu0 %v126
    %v218 = vpop.f32.mrf.mxu0
    %v219 = vadd.f32 %v92, %v218
    %v220 = vpop.f32.mrf.mxu0
    %v221 = vadd.f32 %v96, %v220
    %v222 = vpop.f32.mrf.mxu0
    %v223 = vadd.f32 %v92, %v222
    %v224 = vpop.f32.mrf.mxu0
    %v225 = vadd.f32 %v96, %v224
    %226 = vmatprep.mubr.bf16.mxu0 0
    %227 = vmatmul.mubr.bf16.gmra.mxu0 %v129
    %v228 = vpop.f32.mrf.mxu0
    %v229 = vadd.f32 %v92, %v228
    %v230 = vpop.f32.mrf.mxu0
    %v231 = vadd.f32 %v96, %v230
    %v232 = vpop.f32.mrf.mxu0
    %v233 = vadd.f32 %v92, %v232
    %v234 = vpop.f32.mrf.mxu0
    %v235 = vadd.f32 %v96, %v234
    %236 = vmatprep.mubr.bf16.mxu0 0
    %237 = vmatmul.mubr.bf16.gmra.mxu0 %v132
    %v238 = vpop.f32.mrf.mxu0
    %v239 = vadd.f32 %v92, %v238
    %v240 = vpop.f32.mrf.mxu0
    %v241 = vadd.f32 %v96, %v240
    %v242 = vpop.f32.mrf.mxu0
    %v243 = vadd.f32 %v92, %v242
    %v244 = vpop.f32.mrf.mxu0
    %v245 = vadd.f32 %v96, %v244
    %246 = vdwg.mxu0
    %v247 = vmul.f32 %v169, 0.01
    %v248 = vmul.f32 %v171, 0.01
    %v249 = vmul.f32 %v173, 0.01
    %v250 = vmul.f32 %v175, 0.01
    %v251 = vmul.f32 %v179, 0.01
    %v252 = vmul.f32 %v181, 0.01
    %v253 = vmul.f32 %v183, 0.01
    %v254 = vmul.f32 %v185, 0.01
    %v255 = vmul.f32 %v189, 0.01
    %v256 = vmul.f32 %v191, 0.01
    %v257 = vmul.f32 %v193, 0.01
    %v258 = vmul.f32 %v195, 0.01
    %v259 = vmul.f32 %v199, 0.01
    %v260 = vmul.f32 %v201, 0.01
    %v261 = vmul.f32 %v203, 0.01
    %v262 = vmul.f32 %v205, 0.01
    %v263 = vmul.f32 %v209, 0.01
    %v264 = vmul.f32 %v211, 0.01
    %v265 = vmul.f32 %v213, 0.01
    %v266 = vmul.f32 %v215, 0.01
    %v267 = vmul.f32 %v219, 0.01
    %v268 = vmul.f32 %v221, 0.01
    %v269 = vmul.f32 %v223, 0.01
    %v270 = vmul.f32 %v225, 0.01
    %v271 = vmul.f32 %v229, 0.01
    %v272 = vmul.f32 %v231, 0.01
    %v273 = vmul.f32 %v233, 0.01
    %v274 = vmul.f32 %v235, 0.01
    %v275 = vmul.f32 %v239, 0.01
    %v276 = vmul.f32 %v241, 0.01
    %v277 = vmul.f32 %v243, 0.01
    %v278 = vmul.f32 %v245, 0.01
    %v279 = vmax.f32 %v169, %v247
    %v280 = vmax.f32 %v171, %v248
    %v281 = vmax.f32 %v173, %v249
    %v282 = vmax.f32 %v175, %v250
    %v283 = vmax.f32 %v179, %v251
    %v284 = vmax.f32 %v181, %v252
    %v285 = vmax.f32 %v183, %v253
    %v286 = vmax.f32 %v185, %v254
    %v287 = vmax.f32 %v189, %v255
    %v288 = vmax.f32 %v191, %v256
    %v289 = vmax.f32 %v193, %v257
    %v290 = vmax.f32 %v195, %v258
    %v291 = vmax.f32 %v199, %v259
    %v292 = vmax.f32 %v201, %v260
    %v293 = vmax.f32 %v203, %v261
    %v294 = vmax.f32 %v205, %v262
    %v295 = vmax.f32 %v209, %v263
    %v296 = vmax.f32 %v211, %v264
    %v297 = vmax.f32 %v213, %v265
    %v298 = vmax.f32 %v215, %v266
    %v299 = vmax.f32 %v219, %v267
    %v300 = vmax.f32 %v221, %v268
    %v301 = vmax.f32 %v223, %v269
    %v302 = vmax.f32 %v225, %v270
    %v303 = vmax.f32 %v229, %v271
    %v304 = vmax.f32 %v231, %v272
    %v305 = vmax.f32 %v233, %v273
    %v306 = vmax.f32 %v235, %v274
    %v307 = vmax.f32 %v239, %v275
    %v308 = vmax.f32 %v241, %v276
    %v309 = vmax.f32 %v243, %v277
    %v310 = vmax.f32 %v245, %v278
    %v311 = vpack.c.bf16 %v281, %v279
    %v312 = vpack.c.bf16 %v282, %v280
    %v313 = vpack.c.bf16 %v285, %v283
    %v314 = vpack.c.bf16 %v286, %v284
    %v315 = vpack.c.bf16 %v289, %v287
    %v316 = vpack.c.bf16 %v290, %v288
    %v317 = vpack.c.bf16 %v293, %v291
    %v318 = vpack.c.bf16 %v294, %v292
    %v319 = vpack.c.bf16 %v297, %v295
    %v320 = vpack.c.bf16 %v298, %v296
    %v321 = vpack.c.bf16 %v301, %v299
    %v322 = vpack.c.bf16 %v302, %v300
    %v323 = vpack.c.bf16 %v305, %v303
    %v324 = vpack.c.bf16 %v306, %v304
    %v325 = vpack.c.bf16 %v309, %v307
    %v326 = vpack.c.bf16 %v310, %v308
    %v327 = vld [vmem:[#allocation2] sm:$0xff]
    %v328 = vld [vmem:[#allocation2 + $0x8] sm:$0xff]
    %v329 = vld [vmem:[#allocation2 + $0x10] sm:$0xff]
    %v330 = vld [vmem:[#allocation2 + $0x18] sm:$0xff]
    %v331 = vld [vmem:[#allocation2 + $0x20] sm:$0xff]
    %v332 = vld [vmem:[#allocation2 + $0x28] sm:$0xff]
    %v333 = vld [vmem:[#allocation2 + $0x30] sm:$0xff]
    %v334 = vld [vmem:[#allocation2 + $0x38] sm:$0xff]
    %v335 = vld [vmem:[#allocation2 + $0x40] sm:$0xff]
    %v336 = vld [vmem:[#allocation2 + $0x48] sm:$0xff]
    %v337 = vld [vmem:[#allocation2 + $0x50] sm:$0xff]
    %v338 = vld [vmem:[#allocation2 + $0x58] sm:$0xff]
    %v339 = vld [vmem:[#allocation2 + $0x60] sm:$0xff]
    %v340 = vld [vmem:[#allocation2 + $0x68] sm:$0xff]
    %v341 = vld [vmem:[#allocation2 + $0x70] sm:$0xff]
    %v342 = vld [vmem:[#allocation2 + $0x78] sm:$0xff]
    %v343 = vld [vmem:[#allocation2 + $0x80] sm:$0xff]
    %v344 = vld [vmem:[#allocation2 + $0x88] sm:$0xff]
    %v345 = vld [vmem:[#allocation2 + $0x90] sm:$0xff]
    %v346 = vld [vmem:[#allocation2 + $0x98] sm:$0xff]
    %v347 = vld [vmem:[#allocation2 + $0xa0] sm:$0xff]
    %v348 = vld [vmem:[#allocation2 + $0xa8] sm:$0xff]
    %v349 = vld [vmem:[#allocation2 + $0xb0] sm:$0xff]
    %v350 = vld [vmem:[#allocation2 + $0xb8] sm:$0xff]
    %v351 = vld [vmem:[#allocation2 + $0xc0] sm:$0xff]
    %v352 = vld [vmem:[#allocation2 + $0xc8] sm:$0xff]
    %v353 = vld [vmem:[#allocation2 + $0xd0] sm:$0xff]
    %v354 = vld [vmem:[#allocation2 + $0xd8] sm:$0xff]
    %v355 = vld [vmem:[#allocation2 + $0xe0] sm:$0xff]
    %v356 = vld [vmem:[#allocation2 + $0xe8] sm:$0xff]
    %v357 = vld [vmem:[#allocation2 + $0xf0] sm:$0xff]
    %v358 = vld [vmem:[#allocation2 + $0xf8] sm:$0xff]
    %v359 = vld [vmem:[%s4] sm:$0x3]
    %v361 = vlaneseq
    %v362 = vshrl.u32 %v361, 7
    %v363 = vsub.s32 0, %v362
    %v364 = vrot.slane %v359, %v363
    %v365 = vlaneseq
    %v366 = vshrl.u32 %v365, 7
    %v367 = vsub.s32 1, %v366
    %v368 = vrot.slane %v359, %v367
    %v403 = vunpack.c.l.b16 %v327
    %v404 = vunpack.c.h.b16 %v327
    %v405 = vunpack.c.l.b16 %v328
    %v406 = vunpack.c.h.b16 %v328
    %v407 = vunpack.c.l.b16 %v329
    %v408 = vunpack.c.h.b16 %v329
    %v409 = vunpack.c.l.b16 %v330
    %v410 = vunpack.c.h.b16 %v330
    %v411 = vunpack.c.l.b16 %v331
    %v412 = vunpack.c.h.b16 %v331
    %v413 = vunpack.c.l.b16 %v332
    %v414 = vunpack.c.h.b16 %v332
    %v415 = vunpack.c.l.b16 %v333
    %v416 = vunpack.c.h.b16 %v333
    %v417 = vunpack.c.l.b16 %v334
    %v418 = vunpack.c.h.b16 %v334
    %v419 = vunpack.c.l.b16 %v335
    %v420 = vunpack.c.h.b16 %v335
    %v421 = vunpack.c.l.b16 %v336
    %v422 = vunpack.c.h.b16 %v336
    %v423 = vunpack.c.l.b16 %v337
    %v424 = vunpack.c.h.b16 %v337
    %v425 = vunpack.c.l.b16 %v338
    %v426 = vunpack.c.h.b16 %v338
    %v427 = vunpack.c.l.b16 %v339
    %v428 = vunpack.c.h.b16 %v339
    %v429 = vunpack.c.l.b16 %v340
    %v430 = vunpack.c.h.b16 %v340
    %v431 = vunpack.c.l.b16 %v341
    %v432 = vunpack.c.h.b16 %v341
    %v433 = vunpack.c.l.b16 %v342
    %v434 = vunpack.c.h.b16 %v342
    %v435 = vunpack.c.l.b16 %v343
    %v436 = vunpack.c.h.b16 %v343
    %v437 = vunpack.c.l.b16 %v344
    %v438 = vunpack.c.h.b16 %v344
    %v439 = vunpack.c.l.b16 %v345
    %v440 = vunpack.c.h.b16 %v345
    %v441 = vunpack.c.l.b16 %v346
    %v442 = vunpack.c.h.b16 %v346
    %v443 = vunpack.c.l.b16 %v347
    %v444 = vunpack.c.h.b16 %v347
    %v445 = vunpack.c.l.b16 %v348
    %v446 = vunpack.c.h.b16 %v348
    %v447 = vunpack.c.l.b16 %v349
    %v448 = vunpack.c.h.b16 %v349
    %v449 = vunpack.c.l.b16 %v350
    %v450 = vunpack.c.h.b16 %v350
    %v451 = vunpack.c.l.b16 %v351
    %v452 = vunpack.c.h.b16 %v351
    %v453 = vunpack.c.l.b16 %v352
    %v454 = vunpack.c.h.b16 %v352
    %v455 = vunpack.c.l.b16 %v353
    %v456 = vunpack.c.h.b16 %v353
    %v457 = vunpack.c.l.b16 %v354
    %v458 = vunpack.c.h.b16 %v354
    %v459 = vunpack.c.l.b16 %v355
    %v460 = vunpack.c.h.b16 %v355
    %v461 = vunpack.c.l.b16 %v356
    %v462 = vunpack.c.h.b16 %v356
    %v463 = vunpack.c.l.b16 %v357
    %v464 = vunpack.c.h.b16 %v357
    %v465 = vunpack.c.l.b16 %v358
    %v466 = vunpack.c.h.b16 %v358
    %v467 = vpack.c.b16 %v405, %v403
    %v468 = vpack.c.b16 %v406, %v404
    %v469 = vpack.c.b16 %v409, %v407
    %v470 = vpack.c.b16 %v410, %v408
    %v471 = vpack.c.b16 %v413, %v411
    %v472 = vpack.c.b16 %v414, %v412
    %v473 = vpack.c.b16 %v417, %v415
    %v474 = vpack.c.b16 %v418, %v416
    %v475 = vpack.c.b16 %v421, %v419
    %v476 = vpack.c.b16 %v422, %v420
    %v477 = vpack.c.b16 %v425, %v423
    %v478 = vpack.c.b16 %v426, %v424
    %v479 = vpack.c.b16 %v429, %v427
    %v480 = vpack.c.b16 %v430, %v428
    %v481 = vpack.c.b16 %v433, %v431
    %v482 = vpack.c.b16 %v434, %v432
    %v483 = vpack.c.b16 %v437, %v435
    %v484 = vpack.c.b16 %v438, %v436
    %v485 = vpack.c.b16 %v441, %v439
    %v486 = vpack.c.b16 %v442, %v440
    %v487 = vpack.c.b16 %v445, %v443
    %v488 = vpack.c.b16 %v446, %v444
    %v489 = vpack.c.b16 %v449, %v447
    %v490 = vpack.c.b16 %v450, %v448
    %v491 = vpack.c.b16 %v453, %v451
    %v492 = vpack.c.b16 %v454, %v452
    %v493 = vpack.c.b16 %v457, %v455
    %v494 = vpack.c.b16 %v458, %v456
    %v495 = vpack.c.b16 %v461, %v459
    %v496 = vpack.c.b16 %v462, %v460
    %v497 = vpack.c.b16 %v465, %v463
    %v498 = vpack.c.b16 %v466, %v464
    %531 = vmatprep.subr.bf16.mxu0 %v482
    %532 = vmatpush1.bf16.msra.mxu0 %v481
    %533 = vmatprep.subr.bf16.mxu0 %v480
    %534 = vmatpush1.bf16.msra.mxu0 %v479
    %535 = vmatprep.subr.bf16.mxu0 %v478
    %536 = vmatpush1.bf16.msra.mxu0 %v477
    %537 = vmatprep.subr.bf16.mxu0 %v476
    %538 = vmatpush1.bf16.msra.mxu0 %v475
    %539 = vmatprep.subr.bf16.mxu0 %v474
    %540 = vmatpush1.bf16.msra.mxu0 %v473
    %541 = vmatprep.subr.bf16.mxu0 %v472
    %542 = vmatpush1.bf16.msra.mxu0 %v471
    %543 = vmatprep.subr.bf16.mxu0 %v470
    %544 = vmatpush1.bf16.msra.mxu0 %v469
    %545 = vmatprep.subr.bf16.mxu0 %v468
    %546 = vmatpush1.bf16.msra.mxu0 %v467
    %547 = vmatprep.subr.bf16.mxu0 %v498
    %548 = vmatpush2.bf16.msra.mxu0 %v497
    %549 = vmatprep.subr.bf16.mxu0 %v496
    %550 = vmatpush2.bf16.msra.mxu0 %v495
    %551 = vmatprep.subr.bf16.mxu0 %v494
    %552 = vmatpush2.bf16.msra.mxu0 %v493
    %553 = vmatprep.subr.bf16.mxu0 %v492
    %554 = vmatpush2.bf16.msra.mxu0 %v491
    %555 = vmatprep.subr.bf16.mxu0 %v490
    %556 = vmatpush2.bf16.msra.mxu0 %v489
    %557 = vmatprep.subr.bf16.mxu0 %v488
    %558 = vmatpush2.bf16.msra.mxu0 %v487
    %559 = vmatprep.subr.bf16.mxu0 %v486
    %560 = vmatpush2.bf16.msra.mxu0 %v485
    %561 = vmatprep.subr.bf16.mxu0 %v484
    %562 = vmatpush2.bf16.msra.mxu0 %v483
    %563 = vmatprep.mubr.bf16.mxu0 %v312
    %564 = vmatmul.mubr.bf16.gmra.mxu0 %v311
    %v565 = vpop.f32.mrf.mxu0
    %v566 = vadd.f32 %v364, %v565
    %v567 = vpop.f32.mrf.mxu0
    %v568 = vadd.f32 %v368, %v567
    %v569 = vpop.f32.mrf.mxu0
    %v570 = vadd.f32 %v364, %v569
    %v571 = vpop.f32.mrf.mxu0
    %v572 = vadd.f32 %v368, %v571
    %573 = vmatprep.mubr.bf16.mxu0 %v314
    %574 = vmatmul.mubr.bf16.gmra.mxu0 %v313
    %v575 = vpop.f32.mrf.mxu0
    %v576 = vadd.f32 %v364, %v575
    %v577 = vpop.f32.mrf.mxu0
    %v578 = vadd.f32 %v368, %v577
    %v579 = vpop.f32.mrf.mxu0
    %v580 = vadd.f32 %v364, %v579
    %v581 = vpop.f32.mrf.mxu0
    %v582 = vadd.f32 %v368, %v581
    %583 = vmatprep.mubr.bf16.mxu0 %v316
    %584 = vmatmul.mubr.bf16.gmra.mxu0 %v315
    %v585 = vpop.f32.mrf.mxu0
    %v586 = vadd.f32 %v364, %v585
    %v587 = vpop.f32.mrf.mxu0
    %v588 = vadd.f32 %v368, %v587
    %v589 = vpop.f32.mrf.mxu0
    %v590 = vadd.f32 %v364, %v589
    %v591 = vpop.f32.mrf.mxu0
    %v592 = vadd.f32 %v368, %v591
    %593 = vmatprep.mubr.bf16.mxu0 %v318
    %594 = vmatmul.mubr.bf16.gmra.mxu0 %v317
    %v595 = vpop.f32.mrf.mxu0
    %v596 = vadd.f32 %v364, %v595
    %v597 = vpop.f32.mrf.mxu0
    %v598 = vadd.f32 %v368, %v597
    %v599 = vpop.f32.mrf.mxu0
    %v600 = vadd.f32 %v364, %v599
    %v601 = vpop.f32.mrf.mxu0
    %v602 = vadd.f32 %v368, %v601
    %603 = vmatprep.mubr.bf16.mxu0 %v320
    %604 = vmatmul.mubr.bf16.gmra.mxu0 %v319
    %v605 = vpop.f32.mrf.mxu0
    %v606 = vadd.f32 %v364, %v605
    %v607 = vpop.f32.mrf.mxu0
    %v608 = vadd.f32 %v368, %v607
    %v609 = vpop.f32.mrf.mxu0
    %v610 = vadd.f32 %v364, %v609
    %v611 = vpop.f32.mrf.mxu0
    %v612 = vadd.f32 %v368, %v611
    %613 = vmatprep.mubr.bf16.mxu0 %v322
    %614 = vmatmul.mubr.bf16.gmra.mxu0 %v321
    %v615 = vpop.f32.mrf.mxu0
    %v616 = vadd.f32 %v364, %v615
    %v617 = vpop.f32.mrf.mxu0
    %v618 = vadd.f32 %v368, %v617
    %v619 = vpop.f32.mrf.mxu0
    %v620 = vadd.f32 %v364, %v619
    %v621 = vpop.f32.mrf.mxu0
    %v622 = vadd.f32 %v368, %v621
    %623 = vmatprep.mubr.bf16.mxu0 %v324
    %624 = vmatmul.mubr.bf16.gmra.mxu0 %v323
    %v625 = vpop.f32.mrf.mxu0
    %v626 = vadd.f32 %v364, %v625
    %v627 = vpop.f32.mrf.mxu0
    %v628 = vadd.f32 %v368, %v627
    %v629 = vpop.f32.mrf.mxu0
    %v630 = vadd.f32 %v364, %v629
    %v631 = vpop.f32.mrf.mxu0
    %v632 = vadd.f32 %v368, %v631
    %633 = vmatprep.mubr.bf16.mxu0 %v326
    %634 = vmatmul.mubr.bf16.gmra.mxu0 %v325
    %v635 = vpop.f32.mrf.mxu0
    %v636 = vadd.f32 %v364, %v635
    %v637 = vpop.f32.mrf.mxu0
    %v638 = vadd.f32 %v368, %v637
    %v639 = vpop.f32.mrf.mxu0
    %v640 = vadd.f32 %v364, %v639
    %v641 = vpop.f32.mrf.mxu0
    %v642 = vadd.f32 %v368, %v641
    %643 = vdwg.mxu0
    %v644 = vmul.f32 %v566, 0.01
    %v645 = vmul.f32 %v568, 0.01
    %v646 = vmul.f32 %v570, 0.01
    %v647 = vmul.f32 %v572, 0.01
    %v648 = vmul.f32 %v576, 0.01
    %v649 = vmul.f32 %v578, 0.01
    %v650 = vmul.f32 %v580, 0.01
    %v651 = vmul.f32 %v582, 0.01
    %v652 = vmul.f32 %v586, 0.01
    %v653 = vmul.f32 %v588, 0.01
    %v654 = vmul.f32 %v590, 0.01
    %v655 = vmul.f32 %v592, 0.01
    %v656 = vmul.f32 %v596, 0.01
    %v657 = vmul.f32 %v598, 0.01
    %v658 = vmul.f32 %v600, 0.01
    %v659 = vmul.f32 %v602, 0.01
    %v660 = vmul.f32 %v606, 0.01
    %v661 = vmul.f32 %v608, 0.01
    %v662 = vmul.f32 %v610, 0.01
    %v663 = vmul.f32 %v612, 0.01
    %v664 = vmul.f32 %v616, 0.01
    %v665 = vmul.f32 %v618, 0.01
    %v666 = vmul.f32 %v620, 0.01
    %v667 = vmul.f32 %v622, 0.01
    %v668 = vmul.f32 %v626, 0.01
    %v669 = vmul.f32 %v628, 0.01
    %v670 = vmul.f32 %v630, 0.01
    %v671 = vmul.f32 %v632, 0.01
    %v672 = vmul.f32 %v636, 0.01
    %v673 = vmul.f32 %v638, 0.01
    %v674 = vmul.f32 %v640, 0.01
    %v675 = vmul.f32 %v642, 0.01
    %v676 = vmax.f32 %v566, %v644
    %v677 = vmax.f32 %v568, %v645
    %v678 = vmax.f32 %v570, %v646
    %v679 = vmax.f32 %v572, %v647
    %v680 = vmax.f32 %v576, %v648
    %v681 = vmax.f32 %v578, %v649
    %v682 = vmax.f32 %v580, %v650
    %v683 = vmax.f32 %v582, %v651
    %v684 = vmax.f32 %v586, %v652
    %v685 = vmax.f32 %v588, %v653
    %v686 = vmax.f32 %v590, %v654
    %v687 = vmax.f32 %v592, %v655
    %v688 = vmax.f32 %v596, %v656
    %v689 = vmax.f32 %v598, %v657
    %v690 = vmax.f32 %v600, %v658
    %v691 = vmax.f32 %v602, %v659
    %v692 = vmax.f32 %v606, %v660
    %v693 = vmax.f32 %v608, %v661
    %v694 = vmax.f32 %v610, %v662
    %v695 = vmax.f32 %v612, %v663
    %v696 = vmax.f32 %v616, %v664
    %v697 = vmax.f32 %v618, %v665
    %v698 = vmax.f32 %v620, %v666
    %v699 = vmax.f32 %v622, %v667
    %v700 = vmax.f32 %v626, %v668
    %v701 = vmax.f32 %v628, %v669
    %v702 = vmax.f32 %v630, %v670
    %v703 = vmax.f32 %v632, %v671
    %v704 = vmax.f32 %v636, %v672
    %v705 = vmax.f32 %v638, %v673
    %v706 = vmax.f32 %v640, %v674
    %v707 = vmax.f32 %v642, %v675
    %v708 = vpack.c.bf16 %v678, %v676
    %v709 = vpack.c.bf16 %v679, %v677
    %v710 = vpack.c.bf16 %v682, %v680
    %v711 = vpack.c.bf16 %v683, %v681
    %v712 = vpack.c.bf16 %v686, %v684
    %v713 = vpack.c.bf16 %v687, %v685
    %v714 = vpack.c.bf16 %v690, %v688
    %v715 = vpack.c.bf16 %v691, %v689
    %v716 = vpack.c.bf16 %v694, %v692
    %v717 = vpack.c.bf16 %v695, %v693
    %v718 = vpack.c.bf16 %v698, %v696
    %v719 = vpack.c.bf16 %v699, %v697
    %v720 = vpack.c.bf16 %v702, %v700
    %v721 = vpack.c.bf16 %v703, %v701
    %v722 = vpack.c.bf16 %v706, %v704
    %v723 = vpack.c.bf16 %v707, %v705
    %v724 = vld [vmem:[#allocation4] sm:$0xff]
    %v725 = vld [vmem:[#allocation4 + $0x8] sm:$0xff]
    %v726 = vld [vmem:[#allocation4 + $0x10] sm:$0xff]
    %v727 = vld [vmem:[#allocation4 + $0x18] sm:$0xff]
    %v728 = vld [vmem:[#allocation4 + $0x20] sm:$0xff]
    %v729 = vld [vmem:[#allocation4 + $0x28] sm:$0xff]
    %v730 = vld [vmem:[#allocation4 + $0x30] sm:$0xff]
    %v731 = vld [vmem:[#allocation4 + $0x38] sm:$0xff]
    %v732 = vld [vmem:[#allocation4 + $0x40] sm:$0xff]
    %v733 = vld [vmem:[#allocation4 + $0x48] sm:$0xff]
    %v734 = vld [vmem:[#allocation4 + $0x50] sm:$0xff]
    %v735 = vld [vmem:[#allocation4 + $0x58] sm:$0xff]
    %v736 = vld [vmem:[#allocation4 + $0x60] sm:$0xff]
    %v737 = vld [vmem:[#allocation4 + $0x68] sm:$0xff]
    %v738 = vld [vmem:[#allocation4 + $0x70] sm:$0xff]
    %v739 = vld [vmem:[#allocation4 + $0x78] sm:$0xff]
    %v740 = vld [vmem:[#allocation4 + $0x80] sm:$0xff]
    %v741 = vld [vmem:[#allocation4 + $0x88] sm:$0xff]
    %v742 = vld [vmem:[#allocation4 + $0x90] sm:$0xff]
    %v743 = vld [vmem:[#allocation4 + $0x98] sm:$0xff]
    %v744 = vld [vmem:[#allocation4 + $0xa0] sm:$0xff]
    %v745 = vld [vmem:[#allocation4 + $0xa8] sm:$0xff]
    %v746 = vld [vmem:[#allocation4 + $0xb0] sm:$0xff]
    %v747 = vld [vmem:[#allocation4 + $0xb8] sm:$0xff]
    %v748 = vld [vmem:[#allocation4 + $0xc0] sm:$0xff]
    %v749 = vld [vmem:[#allocation4 + $0xc8] sm:$0xff]
    %v750 = vld [vmem:[#allocation4 + $0xd0] sm:$0xff]
    %v751 = vld [vmem:[#allocation4 + $0xd8] sm:$0xff]
    %v752 = vld [vmem:[#allocation4 + $0xe0] sm:$0xff]
    %v753 = vld [vmem:[#allocation4 + $0xe8] sm:$0xff]
    %v754 = vld [vmem:[#allocation4 + $0xf0] sm:$0xff]
    %v755 = vld [vmem:[#allocation4 + $0xf8] sm:$0xff]
    %v756 = vld [vmem:[%s6] sm:$0x3]
    %v758 = vlaneseq
    %v759 = vshrl.u32 %v758, 7
    %v760 = vsub.s32 0, %v759
    %v761 = vrot.slane %v756, %v760
    %v762 = vlaneseq
    %v763 = vshrl.u32 %v762, 7
    %v764 = vsub.s32 1, %v763
    %v765 = vrot.slane %v756, %v764
    %v800 = vunpack.c.l.b16 %v724
    %v801 = vunpack.c.h.b16 %v724
    %v802 = vunpack.c.l.b16 %v725
    %v803 = vunpack.c.h.b16 %v725
    %v804 = vunpack.c.l.b16 %v726
    %v805 = vunpack.c.h.b16 %v726
    %v806 = vunpack.c.l.b16 %v727
    %v807 = vunpack.c.h.b16 %v727
    %v808 = vunpack.c.l.b16 %v728
    %v809 = vunpack.c.h.b16 %v728
    %v810 = vunpack.c.l.b16 %v729
    %v811 = vunpack.c.h.b16 %v729
    %v812 = vunpack.c.l.b16 %v730
    %v813 = vunpack.c.h.b16 %v730
    %v814 = vunpack.c.l.b16 %v731
    %v815 = vunpack.c.h.b16 %v731
    %v816 = vunpack.c.l.b16 %v732
    %v817 = vunpack.c.h.b16 %v732
    %v818 = vunpack.c.l.b16 %v733
    %v819 = vunpack.c.h.b16 %v733
    %v820 = vunpack.c.l.b16 %v734
    %v821 = vunpack.c.h.b16 %v734
    %v822 = vunpack.c.l.b16 %v735
    %v823 = vunpack.c.h.b16 %v735
    %v824 = vunpack.c.l.b16 %v736
    %v825 = vunpack.c.h.b16 %v736
    %v826 = vunpack.c.l.b16 %v737
    %v827 = vunpack.c.h.b16 %v737
    %v828 = vunpack.c.l.b16 %v738
    %v829 = vunpack.c.h.b16 %v738
    %v830 = vunpack.c.l.b16 %v739
    %v831 = vunpack.c.h.b16 %v739
    %v832 = vunpack.c.l.b16 %v740
    %v833 = vunpack.c.h.b16 %v740
    %v834 = vunpack.c.l.b16 %v741
    %v835 = vunpack.c.h.b16 %v741
    %v836 = vunpack.c.l.b16 %v742
    %v837 = vunpack.c.h.b16 %v742
    %v838 = vunpack.c.l.b16 %v743
    %v839 = vunpack.c.h.b16 %v743
    %v840 = vunpack.c.l.b16 %v744
    %v841 = vunpack.c.h.b16 %v744
    %v842 = vunpack.c.l.b16 %v745
    %v843 = vunpack.c.h.b16 %v745
    %v844 = vunpack.c.l.b16 %v746
    %v845 = vunpack.c.h.b16 %v746
    %v846 = vunpack.c.l.b16 %v747
    %v847 = vunpack.c.h.b16 %v747
    %v848 = vunpack.c.l.b16 %v748
    %v849 = vunpack.c.h.b16 %v748
    %v850 = vunpack.c.l.b16 %v749
    %v851 = vunpack.c.h.b16 %v749
    %v852 = vunpack.c.l.b16 %v750
    %v853 = vunpack.c.h.b16 %v750
    %v854 = vunpack.c.l.b16 %v751
    %v855 = vunpack.c.h.b16 %v751
    %v856 = vunpack.c.l.b16 %v752
    %v857 = vunpack.c.h.b16 %v752
    %v858 = vunpack.c.l.b16 %v753
    %v859 = vunpack.c.h.b16 %v753
    %v860 = vunpack.c.l.b16 %v754
    %v861 = vunpack.c.h.b16 %v754
    %v862 = vunpack.c.l.b16 %v755
    %v863 = vunpack.c.h.b16 %v755
    %v864 = vpack.c.b16 %v802, %v800
    %v865 = vpack.c.b16 %v803, %v801
    %v866 = vpack.c.b16 %v806, %v804
    %v867 = vpack.c.b16 %v807, %v805
    %v868 = vpack.c.b16 %v810, %v808
    %v869 = vpack.c.b16 %v811, %v809
    %v870 = vpack.c.b16 %v814, %v812
    %v871 = vpack.c.b16 %v815, %v813
    %v872 = vpack.c.b16 %v818, %v816
    %v873 = vpack.c.b16 %v819, %v817
    %v874 = vpack.c.b16 %v822, %v820
    %v875 = vpack.c.b16 %v823, %v821
    %v876 = vpack.c.b16 %v826, %v824
    %v877 = vpack.c.b16 %v827, %v825
    %v878 = vpack.c.b16 %v830, %v828
    %v879 = vpack.c.b16 %v831, %v829
    %v880 = vpack.c.b16 %v834, %v832
    %v881 = vpack.c.b16 %v835, %v833
    %v882 = vpack.c.b16 %v838, %v836
    %v883 = vpack.c.b16 %v839, %v837
    %v884 = vpack.c.b16 %v842, %v840
    %v885 = vpack.c.b16 %v843, %v841
    %v886 = vpack.c.b16 %v846, %v844
    %v887 = vpack.c.b16 %v847, %v845
    %v888 = vpack.c.b16 %v850, %v848
    %v889 = vpack.c.b16 %v851, %v849
    %v890 = vpack.c.b16 %v854, %v852
    %v891 = vpack.c.b16 %v855, %v853
    %v892 = vpack.c.b16 %v858, %v856
    %v893 = vpack.c.b16 %v859, %v857
    %v894 = vpack.c.b16 %v862, %v860
    %v895 = vpack.c.b16 %v863, %v861
    %928 = vmatprep.subr.bf16.mxu0 %v879
    %929 = vmatpush1.bf16.msra.mxu0 %v878
    %930 = vmatprep.subr.bf16.mxu0 %v877
    %931 = vmatpush1.bf16.msra.mxu0 %v876
    %932 = vmatprep.subr.bf16.mxu0 %v875
    %933 = vmatpush1.bf16.msra.mxu0 %v874
    %934 = vmatprep.subr.bf16.mxu0 %v873
    %935 = vmatpush1.bf16.msra.mxu0 %v872
    %936 = vmatprep.subr.bf16.mxu0 %v871
    %937 = vmatpush1.bf16.msra.mxu0 %v870
    %938 = vmatprep.subr.bf16.mxu0 %v869
    %939 = vmatpush1.bf16.msra.mxu0 %v868
    %940 = vmatprep.subr.bf16.mxu0 %v867
    %941 = vmatpush1.bf16.msra.mxu0 %v866
    %942 = vmatprep.subr.bf16.mxu0 %v865
    %943 = vmatpush1.bf16.msra.mxu0 %v864
    %944 = vmatprep.subr.bf16.mxu0 %v895
    %945 = vmatpush2.bf16.msra.mxu0 %v894
    %946 = vmatprep.subr.bf16.mxu0 %v893
    %947 = vmatpush2.bf16.msra.mxu0 %v892
    %948 = vmatprep.subr.bf16.mxu0 %v891
    %949 = vmatpush2.bf16.msra.mxu0 %v890
    %950 = vmatprep.subr.bf16.mxu0 %v889
    %951 = vmatpush2.bf16.msra.mxu0 %v888
    %952 = vmatprep.subr.bf16.mxu0 %v887
    %953 = vmatpush2.bf16.msra.mxu0 %v886
    %954 = vmatprep.subr.bf16.mxu0 %v885
    %955 = vmatpush2.bf16.msra.mxu0 %v884
    %956 = vmatprep.subr.bf16.mxu0 %v883
    %957 = vmatpush2.bf16.msra.mxu0 %v882
    %958 = vmatprep.subr.bf16.mxu0 %v881
    %959 = vmatpush2.bf16.msra.mxu0 %v880
    %960 = vmatprep.mubr.bf16.mxu0 %v709
    %961 = vmatmul.mubr.bf16.gmra.mxu0 %v708
    %v962 = vpop.f32.mrf.mxu0
    %v963 = vadd.f32 %v761, %v962
    %v964 = vpop.f32.mrf.mxu0
    %v965 = vadd.f32 %v765, %v964
    %v966 = vpop.f32.mrf.mxu0
    %v967 = vadd.f32 %v761, %v966
    %v968 = vpop.f32.mrf.mxu0
    %v969 = vadd.f32 %v765, %v968
    %970 = vmatprep.mubr.bf16.mxu0 %v711
    %971 = vmatmul.mubr.bf16.gmra.mxu0 %v710
    %v972 = vpop.f32.mrf.mxu0
    %v973 = vadd.f32 %v761, %v972
    %v974 = vpop.f32.mrf.mxu0
    %v975 = vadd.f32 %v765, %v974
    %v976 = vpop.f32.mrf.mxu0
    %v977 = vadd.f32 %v761, %v976
    %v978 = vpop.f32.mrf.mxu0
    %v979 = vadd.f32 %v765, %v978
    %980 = vmatprep.mubr.bf16.mxu0 %v713
    %981 = vmatmul.mubr.bf16.gmra.mxu0 %v712
    %v982 = vpop.f32.mrf.mxu0
    %v983 = vadd.f32 %v761, %v982
    %v984 = vpop.f32.mrf.mxu0
    %v985 = vadd.f32 %v765, %v984
    %v986 = vpop.f32.mrf.mxu0
    %v987 = vadd.f32 %v761, %v986
    %v988 = vpop.f32.mrf.mxu0
    %v989 = vadd.f32 %v765, %v988
    %990 = vmatprep.mubr.bf16.mxu0 %v715
    %991 = vmatmul.mubr.bf16.gmra.mxu0 %v714
    %v992 = vpop.f32.mrf.mxu0
    %v993 = vadd.f32 %v761, %v992
    %v994 = vpop.f32.mrf.mxu0
    %v995 = vadd.f32 %v765, %v994
    %v996 = vpop.f32.mrf.mxu0
    %v997 = vadd.f32 %v761, %v996
    %v998 = vpop.f32.mrf.mxu0
    %v999 = vadd.f32 %v765, %v998
    %1000 = vmatprep.mubr.bf16.mxu0 %v717
    %1001 = vmatmul.mubr.bf16.gmra.mxu0 %v716
    %v1002 = vpop.f32.mrf.mxu0
    %v1003 = vadd.f32 %v761, %v1002
    %v1004 = vpop.f32.mrf.mxu0
    %v1005 = vadd.f32 %v765, %v1004
    %v1006 = vpop.f32.mrf.mxu0
    %v1007 = vadd.f32 %v761, %v1006
    %v1008 = vpop.f32.mrf.mxu0
    %v1009 = vadd.f32 %v765, %v1008
    %1010 = vmatprep.mubr.bf16.mxu0 %v719
    %1011 = vmatmul.mubr.bf16.gmra.mxu0 %v718
    %v1012 = vpop.f32.mrf.mxu0
    %v1013 = vadd.f32 %v761, %v1012
    %v1014 = vpop.f32.mrf.mxu0
    %v1015 = vadd.f32 %v765, %v1014
    %v1016 = vpop.f32.mrf.mxu0
    %v1017 = vadd.f32 %v761, %v1016
    %v1018 = vpop.f32.mrf.mxu0
    %v1019 = vadd.f32 %v765, %v1018
    %1020 = vmatprep.mubr.bf16.mxu0 %v721
    %1021 = vmatmul.mubr.bf16.gmra.mxu0 %v720
    %v1022 = vpop.f32.mrf.mxu0
    %v1023 = vadd.f32 %v761, %v1022
    %v1024 = vpop.f32.mrf.mxu0
    %v1025 = vadd.f32 %v765, %v1024
    %v1026 = vpop.f32.mrf.mxu0
    %v1027 = vadd.f32 %v761, %v1026
    %v1028 = vpop.f32.mrf.mxu0
    %v1029 = vadd.f32 %v765, %v1028
    %1030 = vmatprep.mubr.bf16.mxu0 %v723
    %1031 = vmatmul.mubr.bf16.gmra.mxu0 %v722
    %v1032 = vpop.f32.mrf.mxu0
    %v1033 = vadd.f32 %v761, %v1032
    %v1034 = vpop.f32.mrf.mxu0
    %v1035 = vadd.f32 %v765, %v1034
    %v1036 = vpop.f32.mrf.mxu0
    %v1037 = vadd.f32 %v761, %v1036
    %v1038 = vpop.f32.mrf.mxu0
    %v1039 = vadd.f32 %v765, %v1038
    %1040 = vdwg.mxu0
    %v1041 = vmul.f32 %v963, 0.01
    %v1042 = vmul.f32 %v965, 0.01
    %v1043 = vmul.f32 %v967, 0.01
    %v1044 = vmul.f32 %v969, 0.01
    %v1045 = vmul.f32 %v973, 0.01
    %v1046 = vmul.f32 %v975, 0.01
    %v1047 = vmul.f32 %v977, 0.01
    %v1048 = vmul.f32 %v979, 0.01
    %v1049 = vmul.f32 %v983, 0.01
    %v1050 = vmul.f32 %v985, 0.01
    %v1051 = vmul.f32 %v987, 0.01
    %v1052 = vmul.f32 %v989, 0.01
    %v1053 = vmul.f32 %v993, 0.01
    %v1054 = vmul.f32 %v995, 0.01
    %v1055 = vmul.f32 %v997, 0.01
    %v1056 = vmul.f32 %v999, 0.01
    %v1057 = vmul.f32 %v1003, 0.01
    %v1058 = vmul.f32 %v1005, 0.01
    %v1059 = vmul.f32 %v1007, 0.01
    %v1060 = vmul.f32 %v1009, 0.01
    %v1061 = vmul.f32 %v1013, 0.01
    %v1062 = vmul.f32 %v1015, 0.01
    %v1063 = vmul.f32 %v1017, 0.01
    %v1064 = vmul.f32 %v1019, 0.01
    %v1065 = vmul.f32 %v1023, 0.01
    %v1066 = vmul.f32 %v1025, 0.01
    %v1067 = vmul.f32 %v1027, 0.01
    %v1068 = vmul.f32 %v1029, 0.01
    %v1069 = vmul.f32 %v1033, 0.01
    %v1070 = vmul.f32 %v1035, 0.01
    %v1071 = vmul.f32 %v1037, 0.01
    %v1072 = vmul.f32 %v1039, 0.01
    %v1073 = vmax.f32 %v963, %v1041
    %v1074 = vmax.f32 %v965, %v1042
    %v1075 = vmax.f32 %v967, %v1043
    %v1076 = vmax.f32 %v969, %v1044
    %v1077 = vmax.f32 %v973, %v1045
    %v1078 = vmax.f32 %v975, %v1046
    %v1079 = vmax.f32 %v977, %v1047
    %v1080 = vmax.f32 %v979, %v1048
    %v1081 = vmax.f32 %v983, %v1049
    %v1082 = vmax.f32 %v985, %v1050
    %v1083 = vmax.f32 %v987, %v1051
    %v1084 = vmax.f32 %v989, %v1052
    %v1085 = vmax.f32 %v993, %v1053
    %v1086 = vmax.f32 %v995, %v1054
    %v1087 = vmax.f32 %v997, %v1055
    %v1088 = vmax.f32 %v999, %v1056
    %v1089 = vmax.f32 %v1003, %v1057
    %v1090 = vmax.f32 %v1005, %v1058
    %v1091 = vmax.f32 %v1007, %v1059
    %v1092 = vmax.f32 %v1009, %v1060
    %v1093 = vmax.f32 %v1013, %v1061
    %v1094 = vmax.f32 %v1015, %v1062
    %v1095 = vmax.f32 %v1017, %v1063
    %v1096 = vmax.f32 %v1019, %v1064
    %v1097 = vmax.f32 %v1023, %v1065
    %v1098 = vmax.f32 %v1025, %v1066
    %v1099 = vmax.f32 %v1027, %v1067
    %v1100 = vmax.f32 %v1029, %v1068
    %v1101 = vmax.f32 %v1033, %v1069
    %v1102 = vmax.f32 %v1035, %v1070
    %v1103 = vmax.f32 %v1037, %v1071
    %v1104 = vmax.f32 %v1039, %v1072
    %v1105 = vpack.c.bf16 %v1075, %v1073
    %v1106 = vpack.c.bf16 %v1076, %v1074
    %v1107 = vpack.c.bf16 %v1079, %v1077
    %v1108 = vpack.c.bf16 %v1080, %v1078
    %v1109 = vpack.c.bf16 %v1083, %v1081
    %v1110 = vpack.c.bf16 %v1084, %v1082
    %v1111 = vpack.c.bf16 %v1087, %v1085
    %v1112 = vpack.c.bf16 %v1088, %v1086
    %v1113 = vpack.c.bf16 %v1091, %v1089
    %v1114 = vpack.c.bf16 %v1092, %v1090
    %v1115 = vpack.c.bf16 %v1095, %v1093
    %v1116 = vpack.c.bf16 %v1096, %v1094
    %v1117 = vpack.c.bf16 %v1099, %v1097
    %v1118 = vpack.c.bf16 %v1100, %v1098
    %v1119 = vpack.c.bf16 %v1103, %v1101
    %v1120 = vpack.c.bf16 %v1104, %v1102
    %v1121 = vld [vmem:[%s7] sm:$0xf]
    %v1122 = vld [vmem:[%s7 + $0x4] sm:$0xf]
    %v1123 = vld [vmem:[%s7 + $0x8] sm:$0xf]
    %v1124 = vld [vmem:[%s7 + $0xc] sm:$0xf]
    %v1125 = vld [vmem:[%s7 + $0x10] sm:$0xf]
    %v1126 = vld [vmem:[%s7 + $0x14] sm:$0xf]
    %v1127 = vld [vmem:[%s7 + $0x18] sm:$0xf]
    %v1128 = vld [vmem:[%s7 + $0x1c] sm:$0xf]
    %v1129 = vld [vmem:[%s7 + $0x20] sm:$0xf]
    %v1130 = vld [vmem:[%s7 + $0x24] sm:$0xf]
    %v1131 = vld [vmem:[%s7 + $0x28] sm:$0xf]
    %v1132 = vld [vmem:[%s7 + $0x2c] sm:$0xf]
    %v1133 = vld [vmem:[%s7 + $0x30] sm:$0xf]
    %v1134 = vld [vmem:[%s7 + $0x34] sm:$0xf]
    %v1135 = vld [vmem:[%s7 + $0x38] sm:$0xf]
    %v1136 = vld [vmem:[%s7 + $0x3c] sm:$0xf]
    %v1137 = vld [vmem:[%s7 + $0x40] sm:$0xf]
    %v1138 = vld [vmem:[%s7 + $0x44] sm:$0xf]
    %v1139 = vld [vmem:[%s7 + $0x48] sm:$0xf]
    %v1140 = vld [vmem:[%s7 + $0x4c] sm:$0xf]
    %v1141 = vld [vmem:[%s7 + $0x50] sm:$0xf]
    %v1142 = vld [vmem:[%s7 + $0x54] sm:$0xf]
    %v1143 = vld [vmem:[%s7 + $0x58] sm:$0xf]
    %v1144 = vld [vmem:[%s7 + $0x5c] sm:$0xf]
    %v1145 = vld [vmem:[%s7 + $0x60] sm:$0xf]
    %v1146 = vld [vmem:[%s7 + $0x64] sm:$0xf]
    %v1147 = vld [vmem:[%s7 + $0x68] sm:$0xf]
    %v1148 = vld [vmem:[%s7 + $0x6c] sm:$0xf]
    %v1149 = vld [vmem:[%s7 + $0x70] sm:$0xf]
    %v1150 = vld [vmem:[%s7 + $0x74] sm:$0xf]
    %v1151 = vld [vmem:[%s7 + $0x78] sm:$0xf]
    %v1152 = vld [vmem:[%s7 + $0x7c] sm:$0xf]
    %v1153 = vld [vmem:[%s8] sm:$0x1]
    %v1155 = vlaneseq
    %v1156 = vshrl.u32 %v1155, 7
    %v1157 = vsub.s32 0, %v1156
    %v1158 = vrot.slane %v1153, %v1157
    %v1192 = vunpack.c.l.b16 %v1121
    %v1193 = vunpack.c.l.b16 %v1122
    %v1194 = vunpack.c.l.b16 %v1123
    %v1195 = vunpack.c.l.b16 %v1124
    %v1196 = vunpack.c.l.b16 %v1125
    %v1197 = vunpack.c.l.b16 %v1126
    %v1198 = vunpack.c.l.b16 %v1127
    %v1199 = vunpack.c.l.b16 %v1128
    %v1200 = vunpack.c.l.b16 %v1129
    %v1201 = vunpack.c.l.b16 %v1130
    %v1202 = vunpack.c.l.b16 %v1131
    %v1203 = vunpack.c.l.b16 %v1132
    %v1204 = vunpack.c.l.b16 %v1133
    %v1205 = vunpack.c.l.b16 %v1134
    %v1206 = vunpack.c.l.b16 %v1135
    %v1207 = vunpack.c.l.b16 %v1136
    %v1208 = vunpack.c.l.b16 %v1137
    %v1209 = vunpack.c.l.b16 %v1138
    %v1210 = vunpack.c.l.b16 %v1139
    %v1211 = vunpack.c.l.b16 %v1140
    %v1212 = vunpack.c.l.b16 %v1141
    %v1213 = vunpack.c.l.b16 %v1142
    %v1214 = vunpack.c.l.b16 %v1143
    %v1215 = vunpack.c.l.b16 %v1144
    %v1216 = vunpack.c.l.b16 %v1145
    %v1217 = vunpack.c.l.b16 %v1146
    %v1218 = vunpack.c.l.b16 %v1147
    %v1219 = vunpack.c.l.b16 %v1148
    %v1220 = vunpack.c.l.b16 %v1149
    %v1221 = vunpack.c.l.b16 %v1150
    %v1222 = vunpack.c.l.b16 %v1151
    %v1223 = vunpack.c.l.b16 %v1152
    %v1224 = vpack.c.b16 %v1193, %v1192
    %v1225 = vpack.c.b16 %v1195, %v1194
    %v1226 = vpack.c.b16 %v1197, %v1196
    %v1227 = vpack.c.b16 %v1199, %v1198
    %v1228 = vpack.c.b16 %v1201, %v1200
    %v1229 = vpack.c.b16 %v1203, %v1202
    %v1230 = vpack.c.b16 %v1205, %v1204
    %v1231 = vpack.c.b16 %v1207, %v1206
    %v1232 = vpack.c.b16 %v1209, %v1208
    %v1233 = vpack.c.b16 %v1211, %v1210
    %v1234 = vpack.c.b16 %v1213, %v1212
    %v1235 = vpack.c.b16 %v1215, %v1214
    %v1236 = vpack.c.b16 %v1217, %v1216
    %v1237 = vpack.c.b16 %v1219, %v1218
    %v1238 = vpack.c.b16 %v1221, %v1220
    %v1239 = vpack.c.b16 %v1223, %v1222
    %1256 = vmatprep.subr.bf16.mxu0 0
    %1257 = vmatpush1.bf16.msra.mxu0 %v1231
    %1258 = vmatprep.subr.bf16.mxu0 0
    %1259 = vmatpush1.bf16.msra.mxu0 %v1230
    %1260 = vmatprep.subr.bf16.mxu0 0
    %1261 = vmatpush1.bf16.msra.mxu0 %v1229
    %1262 = vmatprep.subr.bf16.mxu0 0
    %1263 = vmatpush1.bf16.msra.mxu0 %v1228
    %1264 = vmatprep.subr.bf16.mxu0 0
    %1265 = vmatpush1.bf16.msra.mxu0 %v1227
    %1266 = vmatprep.subr.bf16.mxu0 0
    %1267 = vmatpush1.bf16.msra.mxu0 %v1226
    %1268 = vmatprep.subr.bf16.mxu0 0
    %1269 = vmatpush1.bf16.msra.mxu0 %v1225
    %1270 = vmatprep.subr.bf16.mxu0 0
    %1271 = vmatpush1.bf16.msra.mxu0 %v1224
    %1272 = vmatprep.subr.bf16.mxu0 0
    %1273 = vmatpush2.bf16.msra.mxu0 %v1239
    %1274 = vmatprep.subr.bf16.mxu0 0
    %1275 = vmatpush2.bf16.msra.mxu0 %v1238
    %1276 = vmatprep.subr.bf16.mxu0 0
    %1277 = vmatpush2.bf16.msra.mxu0 %v1237
    %1278 = vmatprep.subr.bf16.mxu0 0
    %1279 = vmatpush2.bf16.msra.mxu0 %v1236
    %1280 = vmatprep.subr.bf16.mxu0 0
    %1281 = vmatpush2.bf16.msra.mxu0 %v1235
    %1282 = vmatprep.subr.bf16.mxu0 0
    %1283 = vmatpush2.bf16.msra.mxu0 %v1234
    %1284 = vmatprep.subr.bf16.mxu0 0
    %1285 = vmatpush2.bf16.msra.mxu0 %v1233
    %1286 = vmatprep.subr.bf16.mxu0 0
    %1287 = vmatpush2.bf16.msra.mxu0 %v1232
    %1288 = vmatprep.mubr.bf16.mxu0 %v1106
    %1289 = vmatmul.mubr.bf16.gmra.mxu0 %v1105
    %v1290 = vpop.f32.mrf.mxu0
    %v1291 = vadd.f32 %v1158, %v1290
    %v1292 = vpop.f32.mrf.mxu0
    %v1293 = vpop.f32.mrf.mxu0
    %v1294 = vadd.f32 %v1158, %v1293
    %v1295 = vpop.f32.mrf.mxu0
    %1296 = vmatprep.mubr.bf16.mxu0 %v1108
    %1297 = vmatmul.mubr.bf16.gmra.mxu0 %v1107
    %v1298 = vpop.f32.mrf.mxu0
    %v1299 = vadd.f32 %v1158, %v1298
    %v1300 = vpop.f32.mrf.mxu0
    %v1301 = vpop.f32.mrf.mxu0
    %v1302 = vadd.f32 %v1158, %v1301
    %v1303 = vpop.f32.mrf.mxu0
    %1304 = vmatprep.mubr.bf16.mxu0 %v1110
    %1305 = vmatmul.mubr.bf16.gmra.mxu0 %v1109
    %v1306 = vpop.f32.mrf.mxu0
    %v1307 = vadd.f32 %v1158, %v1306
    %v1308 = vpop.f32.mrf.mxu0
    %v1309 = vpop.f32.mrf.mxu0
    %v1310 = vadd.f32 %v1158, %v1309
    %v1311 = vpop.f32.mrf.mxu0
    %1312 = vmatprep.mubr.bf16.mxu0 %v1112
    %1313 = vmatmul.mubr.bf16.gmra.mxu0 %v1111
    %v1314 = vpop.f32.mrf.mxu0
    %v1315 = vadd.f32 %v1158, %v1314
    %v1316 = vpop.f32.mrf.mxu0
    %v1317 = vpop.f32.mrf.mxu0
    %v1318 = vadd.f32 %v1158, %v1317
    %v1319 = vpop.f32.mrf.mxu0
    %1320 = vmatprep.mubr.bf16.mxu0 %v1114
    %1321 = vmatmul.mubr.bf16.gmra.mxu0 %v1113
    %v1322 = vpop.f32.mrf.mxu0
    %v1323 = vadd.f32 %v1158, %v1322
    %v1324 = vpop.f32.mrf.mxu0
    %v1325 = vpop.f32.mrf.mxu0
    %v1326 = vadd.f32 %v1158, %v1325
    %v1327 = vpop.f32.mrf.mxu0
    %1328 = vmatprep.mubr.bf16.mxu0 %v1116
    %1329 = vmatmul.mubr.bf16.gmra.mxu0 %v1115
    %v1330 = vpop.f32.mrf.mxu0
    %v1331 = vadd.f32 %v1158, %v1330
    %v1332 = vpop.f32.mrf.mxu0
    %v1333 = vpop.f32.mrf.mxu0
    %v1334 = vadd.f32 %v1158, %v1333
    %v1335 = vpop.f32.mrf.mxu0
    %1336 = vmatprep.mubr.bf16.mxu0 %v1118
    %1337 = vmatmul.mubr.bf16.gmra.mxu0 %v1117
    %v1338 = vpop.f32.mrf.mxu0
    %v1339 = vadd.f32 %v1158, %v1338
    %v1340 = vpop.f32.mrf.mxu0
    %v1341 = vpop.f32.mrf.mxu0
    %v1342 = vadd.f32 %v1158, %v1341
    %v1343 = vpop.f32.mrf.mxu0
    %1344 = vmatprep.mubr.bf16.mxu0 %v1120
    %1345 = vmatmul.mubr.bf16.gmra.mxu0 %v1119
    %v1346 = vpop.f32.mrf.mxu0
    %v1347 = vadd.f32 %v1158, %v1346
    %v1348 = vpop.f32.mrf.mxu0
    %v1349 = vpop.f32.mrf.mxu0
    %v1350 = vadd.f32 %v1158, %v1349
    %v1351 = vpop.f32.mrf.mxu0
    %1352 = vdwg.mxu0
    %vm1353 = vcmask 64512
    %1354 = vst.msk [vmem:[%s9] sm:$0xff] %vm1353, %v1291
    %1355 = vst.msk [vmem:[%s9 + $0x8] sm:$0xff] %vm1353, %v1294
    %1356 = vst.msk [vmem:[%s9 + $0x10] sm:$0xff] %vm1353, %v1299
    %1357 = vst.msk [vmem:[%s9 + $0x18] sm:$0xff] %vm1353, %v1302
    %1358 = vst.msk [vmem:[%s9 + $0x20] sm:$0xff] %vm1353, %v1307
    %1359 = vst.msk [vmem:[%s9 + $0x28] sm:$0xff] %vm1353, %v1310
    %1360 = vst.msk [vmem:[%s9 + $0x30] sm:$0xff] %vm1353, %v1315
    %1361 = vst.msk [vmem:[%s9 + $0x38] sm:$0xff] %vm1353, %v1318
    %1362 = vst.msk [vmem:[%s9 + $0x40] sm:$0xff] %vm1353, %v1323
    %1363 = vst.msk [vmem:[%s9 + $0x48] sm:$0xff] %vm1353, %v1326
    %1364 = vst.msk [vmem:[%s9 + $0x50] sm:$0xff] %vm1353, %v1331
    %1365 = vst.msk [vmem:[%s9 + $0x58] sm:$0xff] %vm1353, %v1334
    %1366 = vst.msk [vmem:[%s9 + $0x60] sm:$0xff] %vm1353, %v1339
    %1367 = vst.msk [vmem:[%s9 + $0x68] sm:$0xff] %vm1353, %v1342
    %1368 = vst.msk [vmem:[%s9 + $0x70] sm:$0xff] %vm1353, %v1347
    %1369 = vst.msk [vmem:[%s9 + $0x78] sm:$0xff] %vm1353, %v1350
    // Predicated region
    $region46: #{tpu_custom_call.1} parent=1 // pred_check
      _
    $region47: #{tpu_custom_call.1} parent=1 // pred_check_branch
      %1371 = sbr.rel (0) target = $region49
    $region48: #{tpu_custom_call.1} parent=1 // pred_region
      _
    $region49: #{tpu_custom_call.1} parent=1 // pred_fallthru
      _
    // Predicated region
    $region50: #{tpu_custom_call.1} parent=1 // pred_check
      _
    $region51: #{tpu_custom_call.1} parent=1 // pred_check_branch
      %1373 = sbr.rel (0) target = $region53
    $region52: #{tpu_custom_call.1} parent=1 // pred_region
      _
    $region53: #{tpu_custom_call.1} parent=1 // pred_fallthru
      _
    %1374 = vsyncpa [#allocation3], 1
    %1375 = vsyncpa [#allocation5], 1

</llo_original>
